<compile_context>
chip_gen: v7x
topology: tpu7x:2x2x1
jax: 0.10.0
libtpu: 0.0.40
codegen_flags: <defaults>
</compile_context>

<pallas_src>
import jax
import jax.numpy as jnp
from jax.experimental import pallas as pl
from jax.experimental.pallas import tpu as pltpu

_EPS = 1e-8  # torch.nn.functional.cosine_similarity default eps


def _round_up(x: int, m: int) -> int:
    return -(-int(x) // int(m)) * int(m)


def _make_cos_loss_kernel(chunk: int, n_chunks: int):
    """Kernel factory: per-tile SSE with in-tile chunked compute."""

    def kernel(o1_ref, o2_ref, lb_ref, out_ref):
        # o1_ref, o2_ref : (TN, Dp) tile in VMEM (native dtype)
        # lb_ref         : (TN, 1)  f32 labels
        # out_ref        : (1, 1, 1) f32 per-tile partial SSE

        def chunk_sse(r0, acc):
            x1 = o1_ref[pl.ds(r0, chunk), :].astype(jnp.float32)
            x2 = o2_ref[pl.ds(r0, chunk), :].astype(jnp.float32)

            dot = jnp.sum(x1 * x2, axis=1, keepdims=True)     # (chunk, 1)
            n1sq = jnp.sum(x1 * x1, axis=1, keepdims=True)    # (chunk, 1)
            n2sq = jnp.sum(x2 * x2, axis=1, keepdims=True)    # (chunk, 1)
            # Clamp the *product* of squared norms once (torch semantics).
            denom = jnp.maximum(n1sq * n2sq, jnp.float32(_EPS * _EPS))
            cos = dot * jax.lax.rsqrt(denom)                  # EUP rsqrt

            diff = lb_ref[pl.ds(r0, chunk), :] - cos          # (chunk, 1)
            return acc + jnp.sum(diff * diff, keepdims=True)  # (1, 1)

        zero = jnp.zeros((1, 1), jnp.float32)
        if n_chunks == 1:
            sse = chunk_sse(0, zero)
        else:
            def body(c, acc):
                r0 = pl.multiple_of(c * chunk, chunk)
                return chunk_sse(r0, acc)
            sse = jax.lax.fori_loop(0, n_chunks, body, zero)

        out_ref[...] = sse.reshape(1, 1, 1)

    return kernel


def cos_loss(o1, o2, label, pos_label: int = 1, tile_n: int | None = None):
    """Pallas implementation of CosLoss.forward (returns f32 scalar)."""
    # torch.squeeze(x, 0): only drops dim 0 if it has size 1
    if o1.ndim > 2 and o1.shape[0] == 1:
        o1 = jnp.squeeze(o1, axis=0)
    if o2.ndim > 2 and o2.shape[0] == 1:
        o2 = jnp.squeeze(o2, axis=0)
    if o1.ndim != 2 or o2.ndim != 2 or o1.shape != o2.shape:
        raise ValueError(
            "CosLoss kernel expects matching (N, D) embeddings after squeeze(dim=0); "
            f"got {o1.shape} and {o2.shape}")

    n, d = o1.shape

    lb = label.astype(jnp.float32).reshape(-1)
    if lb.shape[0] != n:
        raise ValueError(f"label has {lb.shape[0]} entries, expected {n}")
    if pos_label == 0:
        lb = 1.0 - lb
    lb2 = lb.reshape(n, 1)

    itemsize = o1.dtype.itemsize
    packing = {4: 8, 2: 16, 1: 32}.get(itemsize, 8)  # sublane packing multiple

    # --- pad feature dim to a lane multiple (zero cols are exact no-ops) ---
    d_pad = _round_up(max(d, 1), 128)
    if d_pad != d:
        o1 = jnp.pad(o1, ((0, 0), (0, d_pad - d)))
        o2 = jnp.pad(o2, ((0, 0), (0, d_pad - d)))

    # --- generation-aware VMEM budget (~75% of physical capacity) ---
    try:
        vmem_cap = int(pltpu.get_tpu_info().vmem_capacity_bytes)
    except Exception:
        vmem_cap = 64 * 1024 * 1024  # conservative fallback (safe on v7x too)
    vmem_budget = (vmem_cap * 3) // 4

    # --- row-tile sizing: ~4 MiB per input tile per grid step ---
    bytes_per_row = 2 * d_pad * itemsize + 4  # two input rows + one f32 label
    if tile_n is None:
        tn = (4 * 1024 * 1024) // (d_pad * itemsize)
    else:
        tn = int(tile_n)
    tn = max(packing, _round_up(tn, packing))
    tn = min(tn, _round_up(n, packing))
    # cap so (2 pipeline buffers) x (per-step working set) + slack fits budget
    max_tn = (vmem_budget - (4 << 20)) // (2 * bytes_per_row)
    max_tn = max(packing, (max_tn // packing) * packing)
    tn = min(tn, max_tn)

    # in-kernel compute chunk (bounds vreg live ranges independent of DMA tile)
    chunk = 256
    if tn >= chunk:
        tn = (tn // chunk) * chunk
    else:
        chunk = tn
    n_chunks = tn // chunk

    num_tiles = pl.cdiv(n, tn)
    n_pad = num_tiles * tn
    if n_pad != n:
        pad = n_pad - n
        # Zero rows + zero labels contribute exactly 0 to the SSE.
        o1 = jnp.pad(o1, ((0, pad), (0, 0)))
        o2 = jnp.pad(o2, ((0, pad), (0, 0)))
        lb2 = jnp.pad(lb2, ((0, pad), (0, 0)))

    working = 2 * tn * bytes_per_row + (4 << 20)  # double-buffered tiles + slack
    vmem_limit = int(min(vmem_budget, max(8 << 20, working)))

    kernel = _make_cos_loss_kernel(chunk, n_chunks)

    partial = pl.pallas_call(
        kernel,
        out_shape=jax.ShapeDtypeStruct((num_tiles, 1, 1), jnp.float32),
        grid_spec=pltpu.PrefetchScalarGridSpec(
            num_scalar_prefetch=0,
            grid=(num_tiles,),
            in_specs=[
                pl.BlockSpec((tn, d_pad), lambda i: (i, 0)),
                pl.BlockSpec((tn, d_pad), lambda i: (i, 0)),
                pl.BlockSpec((tn, 1), lambda i: (i, 0)),
            ],
            out_specs=pl.BlockSpec((1, 1, 1), lambda i: (i, 0, 0)),
        ),
        compiler_params=pltpu.CompilerParams(
            dimension_semantics=("parallel",),  # independent per-tile partials
            vmem_limit_bytes=vmem_limit,
        ),
    )(o1, o2, lb2)

    # Tiny wrapper-side reduction of the per-tile partial sums, then mean.
    return jnp.sum(partial) / jnp.float32(n)


def _cos_loss_ref(o1, o2, label, pos_label: int = 1):
    """Pure-JAX reference for validation (same eps formulation)."""
    if o1.ndim > 2 and o1.shape[0] == 1:
        o1 = jnp.squeeze(o1, axis=0)
    if o2.ndim > 2 and o2.shape[0] == 1:
        o2 = jnp.squeeze(o2, axis=0)
    o1 = o1.astype(jnp.float32)
    o2 = o2.astype(jnp.float32)
    dot = jnp.sum(o1 * o2, axis=1)
    n1sq = jnp.sum(o1 * o1, axis=1)
    n2sq = jnp.sum(o2 * o2, axis=1)
    cos = dot / jnp.sqrt(jnp.maximum(n1sq * n2sq, _EPS * _EPS))
    lb = label.astype(jnp.float32)
    if pos_label == 0:
        lb = 1.0 - lb
    return jnp.mean((lb - cos) ** 2)


if __name__ == "__main__":
    key = jax.random.PRNGKey(0)
    k1, k2, k3, k4, k5, k6 = jax.random.split(key, 6)

    # (1, N, D) embeddings; N not a multiple of the tile and D not a multiple
    # of 128, exercising both row and column zero-padding.
    N, D = 20, 96
    o1 = jax.random.normal(k1, (1, N, D), dtype=jnp.float32)
    o2 = jax.random.normal(k2, (1, N, D), dtype=jnp.float32)
    label = jax.random.bernoulli(k3, 0.5, (N,)).astype(jnp.float32)

    # f32 inputs, forced small tile -> multi-tile parallel partial sums
    loss = cos_loss(o1, o2, label, tile_n=8)
    jax.block_until_ready(loss)
    ref = _cos_loss_ref(o1, o2, label)
    assert jnp.allclose(loss, ref, atol=1e-5, rtol=1e-4), (loss, ref)

    # auto tile sizing (single tile here)
    loss_a = cos_loss(o1, o2, label)
    jax.block_until_ready(loss_a)
    assert jnp.allclose(loss_a, ref, atol=1e-5, rtol=1e-4), (loss_a, ref)

    # bf16 inputs: DMA'd narrow, widened in-kernel; tn rounds to 16-row packing
    o1b = o1.astype(jnp.bfloat16)
    o2b = o2.astype(jnp.bfloat16)
    loss_b = cos_loss(o1b, o2b, label, tile_n=8)
    jax.block_until_ready(loss_b)
    ref_b = _cos_loss_ref(o1b, o2b, label)
    assert jnp.allclose(loss_b, ref_b, atol=1e-3, rtol=1e-3), (loss_b, ref_b)

    # pos_label == 0 path
    loss0 = cos_loss(o1, o2, label, pos_label=0)
    jax.block_until_ready(loss0)
    ref0 = _cos_loss_ref(o1, o2, label, pos_label=0)
    assert jnp.allclose(loss0, ref0, atol=1e-5, rtol=1e-4), (loss0, ref0)

    # larger N with a big tile -> exercises in-kernel chunked fori_loop path
    N2, D2 = 600, 96
    o1L = jax.random.normal(k4, (1, N2, D2), dtype=jnp.float32)
    o2L = jax.random.normal(k5, (1, N2, D2), dtype=jnp.float32)
    labelL = jax.random.bernoulli(k6, 0.5, (N2,)).astype(jnp.float32)
    lossL = cos_loss(o1L, o2L, labelL, tile_n=512)
    jax.block_until_ready(lossL)
    refL = _cos_loss_ref(o1L, o2L, labelL)
    assert jnp.allclose(lossL, refL, atol=1e-5, rtol=1e-4), (lossL, refL)

    print("KERNEL_OK")
</pallas_src>

<mosaic_0001>
module attributes {stable_mosaic.version = 11 : i64} {
  func.func @kernel(%arg0: i32, %arg1: memref<8x128xf32, #tpu.memory_space<vmem>>, %arg2: memref<8x128xf32, #tpu.memory_space<vmem>>, %arg3: memref<8x1xf32, #tpu.memory_space<vmem>>, %arg4: memref<1x1x1xf32, #tpu.memory_space<vmem>>) attributes {dimension_semantics = [#tpu.dimension_semantics<parallel>], iteration_bounds = array<i64: 3>, scalar_prefetch = 0 : i64, scratch_operands = 0 : i64, tpu.core_type = #tpu.core_type<tc>, window_params = [{transform_indices = @transform_0, window_bounds = array<i64: 8, 128>}, {transform_indices = @transform_1, window_bounds = array<i64: 8, 128>}, {transform_indices = @transform_2, window_bounds = array<i64: 8, 1>}, {transform_indices = @transform_3, window_bounds = array<i64: 1, 1, 1>}]} {
    %cst = arith.constant 0.000000e+00 : f32
    %0 = vector.broadcast %cst : f32 to vector<1x1xf32>
    %c0 = arith.constant 0 : index
    %c0_0 = arith.constant 0 : index
    %1 = vector.load %arg1[%c0, %c0_0] : memref<8x128xf32, #tpu.memory_space<vmem>>, vector<8x128xf32>
    %c0_1 = arith.constant 0 : index
    %c0_2 = arith.constant 0 : index
    %2 = vector.load %arg2[%c0_1, %c0_2] : memref<8x128xf32, #tpu.memory_space<vmem>>, vector<8x128xf32>
    %3 = arith.mulf %1, %2 : vector<8x128xf32>
    %cst_3 = arith.constant dense<0.000000e+00> : vector<8xf32>
    %4 = vector.multi_reduction <add>, %3, %cst_3 [1] : vector<8x128xf32> to vector<8xf32>
    %5 = vector.shape_cast %4 : vector<8xf32> to vector<8x1xf32>
    %6 = arith.mulf %1, %1 : vector<8x128xf32>
    %cst_4 = arith.constant dense<0.000000e+00> : vector<8xf32>
    %7 = vector.multi_reduction <add>, %6, %cst_4 [1] : vector<8x128xf32> to vector<8xf32>
    %8 = vector.shape_cast %7 : vector<8xf32> to vector<8x1xf32>
    %9 = arith.mulf %2, %2 : vector<8x128xf32>
    %cst_5 = arith.constant dense<0.000000e+00> : vector<8xf32>
    %10 = vector.multi_reduction <add>, %9, %cst_5 [1] : vector<8x128xf32> to vector<8xf32>
    %11 = vector.shape_cast %10 : vector<8xf32> to vector<8x1xf32>
    %12 = arith.mulf %8, %11 : vector<8x1xf32>
    %cst_6 = arith.constant 1.000000e-16 : f32
    %13 = vector.broadcast %cst_6 : f32 to vector<8x1xf32>
    %14 = arith.maximumf %12, %13 : vector<8x1xf32>
    %15 = math.rsqrt %14 : vector<8x1xf32>
    %16 = arith.mulf %5, %15 : vector<8x1xf32>
    %c0_7 = arith.constant 0 : index
    %c0_8 = arith.constant 0 : index
    %17 = vector.load %arg3[%c0_7, %c0_8] : memref<8x1xf32, #tpu.memory_space<vmem>>, vector<8x1xf32>
    %18 = arith.subf %17, %16 : vector<8x1xf32>
    %19 = arith.mulf %18, %18 : vector<8x1xf32>
    %20 = vector.shape_cast %19 : vector<8x1xf32> to vector<1x8x1xf32>
    %cst_9 = arith.constant dense<0.000000e+00> : vector<1xf32>
    %21 = vector.multi_reduction <add>, %20, %cst_9 [1, 2] : vector<1x8x1xf32> to vector<1xf32>
    %22 = vector.shape_cast %21 : vector<1xf32> to vector<1x1x1xf32>
    %23 = vector.extract %22[0, 0, 0] : f32 from vector<1x1x1xf32>
    %24 = vector.broadcast %23 : f32 to vector<1x1xf32>
    %25 = arith.addf %0, %24 : vector<1x1xf32>
    %26 = vector.shape_cast %25 : vector<1x1xf32> to vector<1x1x1xf32>
    %c0_10 = arith.constant 0 : index
    %c0_11 = arith.constant 0 : index
    %c0_12 = arith.constant 0 : index
    %27 = vector.load %arg4[%c0_10, %c0_11, %c0_12] : memref<1x1x1xf32, #tpu.memory_space<vmem>>, vector<1x1x1xf32>
    tpu.vector_store %arg4[%c0_10, %c0_11, %c0_12], %26 {strides = array<i32>} : memref<1x1x1xf32, #tpu.memory_space<vmem>>, vector<1x1x1xf32>,
    return
  }
  func.func @transform_0(%arg0: i32) -> (i32, i32) {
    %c0_i32 = arith.constant 0 : i32
    %c0_i32_0 = arith.constant 0 : i32
    return %arg0, %c0_i32 : i32, i32
  }
  func.func @transform_1(%arg0: i32) -> (i32, i32) {
    %c0_i32 = arith.constant 0 : i32
    %c0_i32_0 = arith.constant 0 : i32
    return %arg0, %c0_i32 : i32, i32
  }
  func.func @transform_2(%arg0: i32) -> (i32, i32) {
    %c0_i32 = arith.constant 0 : i32
    %c0_i32_0 = arith.constant 0 : i32
    return %arg0, %c0_i32 : i32, i32
  }
  func.func @transform_3(%arg0: i32) -> (i32, i32, i32) {
    %c0_i32 = arith.constant 0 : i32
    %c0_i32_0 = arith.constant 0 : i32
    %c0_i32_1 = arith.constant 0 : i32
    return %arg0, %c0_i32, %c0_i32_0 : i32, i32, i32
  }
}

</mosaic_0001>

<llo_original>
// kernel: tpu_custom_call.1
$region0: #{tpu_custom_call.1}
  #allocation0 [shape = 'u32[]', space=smem, size = 0x4, offset = 0x4, fixed_abs, tag = 'smem constant byte address 0x4 - core index']
  #allocation1 [shape = 'u32[144,128]{1,0:T(1,128)}', space=vmem, size = 0x12000, scoped, tag = 'internal scratch']
  %s0 = inlined_call_operand.vmem [shape: f32[24,128], index: 0, kind: input, shape index: {}]
  %s1 = inlined_call_operand.hbm [shape: f32[24,128], index: 1, kind: input, shape index: {}]
  %s2 = inlined_call_operand.vmem [shape: f32[24,1], index: 2, kind: input, shape index: {}]
  %s3 = inlined_call_operand.vmem [shape: f32[3,1,1], index: 3, kind: output, shape index: {}]
  %s4 = sld [smem:[#allocation0]]
  $region49: #{tpu_custom_call.1} parent=0
    _
  %s6 = ssub.s32 1, %s4
  %s7 = scalar_select 0, %s6, %s4
  $region1: #{tpu_custom_call.1} parent=0
    #allocation2 [shape = 'u8[8192]{0}', space=vmem, size = 0x2000, scoped, tag = 'input window, operand 1']
    #allocation3 [shape = 's32[2]{0}', space=sflag, size = 0x8, scoped, tag = 'scoped memory for tpu_custom_call.1']
    %8 = vsyncpa [#allocation3], 0
    %s9 = scalar_lea.sflag [#allocation3], 1
    %10 = vsyncpa %s9, 0
    loop: start=0, step=1, limit=5
    $region2: #{tpu_custom_call.1} parent=1 // loop_pre_header
      _
    $region3: #{tpu_custom_call.1} parent=1 // loop_header
      %s12 = sphi 0, %s16
      %p13 = scmp.ge.s32.totalorder %s12, 5
      %s22 = sphi 0, %s24
      %s25 = sphi 0, %s22
      %s26 = sphi 0, %s25
      %s42 = sphi 0, %s26
      %s48 = sphi 0, %s50
      %s51 = sphi 0, %s48
      %s52 = sphi 0, %s51
      %s68 = sphi 0, %s52
      %s74 = sphi 0, %s76
      %s77 = sphi 0, %s74
      %s78 = sphi 0, %s77
      %s94 = sphi 0, %s78
      %s100 = sphi 0, %s102
      %s103 = sphi 0, %s100
      %s104 = sphi 0, %s103
      %s120 = sphi 0, %s104
    $region4: #{tpu_custom_call.1} parent=1 // loop_header_branch
      %15 = sbr.rel (%p13) target = $region8
    $region5: #{tpu_custom_call.1} parent=1 // loop_body
      %s17 = ssub.s32 %s12, 1
      %s18 = ssub.s32 %s12, 2
      %s19 = sadd.s32 %s12, 1
      %s20 = ssub.s32 %s12, %s19
      %p21 = scmp.eq.s32.totalorder %s20, 0
      %s23 = sadd.s32 %s22, 1
      %s24 = scalar_select %p21, %s22, %s23
      %p27 = pneg %p21
      %p28 = scmp.eq.s32.totalorder %s12, 2
      %p29 = por %p27, %p28
      %p30 = scmp.ne.s32.totalorder %s22, %s25
      %p31 = scmp.eq.s32.totalorder %s12, 0
      %p32 = por %p30, %p31
      %p33 = scmp.ne.s32.totalorder %s22, %s25
      %p34 = scmp.eq.s32.totalorder %s17, 2
      %p35 = por %p33, %p34
      %p36 = scmp.ne.s32.totalorder %s25, %s26
      %p37 = scmp.eq.s32.totalorder %s17, 0
      %p38 = por %p36, %p37
      %p39 = scmp.ne.s32.totalorder %s25, %s26
      %p40 = scmp.eq.s32.totalorder %s18, 2
      %p41 = por %p39, %p40
      %p43 = scmp.ne.s32.totalorder %s26, %s42
      %p44 = scmp.eq.s32.totalorder %s18, 0
      %p45 = por %p43, %p44
      %s46 = ssub.s32 %s12, %s19
      %p47 = scmp.eq.s32.totalorder %s46, 0
      %s49 = sadd.s32 %s48, 1
      %s50 = scalar_select %p47, %s48, %s49
      %p53 = pneg %p47
      %p54 = scmp.eq.s32.totalorder %s12, 2
      %p55 = por %p53, %p54
      %p56 = scmp.ne.s32.totalorder %s48, %s51
      %p57 = scmp.eq.s32.totalorder %s12, 0
      %p58 = por %p56, %p57
      %p59 = scmp.ne.s32.totalorder %s48, %s51
      %p60 = scmp.eq.s32.totalorder %s17, 2
      %p61 = por %p59, %p60
      %p62 = scmp.ne.s32.totalorder %s51, %s52
      %p63 = scmp.eq.s32.totalorder %s17, 0
      %p64 = por %p62, %p63
      %p65 = scmp.ne.s32.totalorder %s51, %s52
      %p66 = scmp.eq.s32.totalorder %s18, 2
      %p67 = por %p65, %p66
      %p69 = scmp.ne.s32.totalorder %s52, %s68
      %p70 = scmp.eq.s32.totalorder %s18, 0
      %p71 = por %p69, %p70
      %s72 = ssub.s32 %s12, %s19
      %p73 = scmp.eq.s32.totalorder %s72, 0
      %s75 = sadd.s32 %s74, 1
      %s76 = scalar_select %p73, %s74, %s75
      %p79 = pneg %p73
      %p80 = scmp.eq.s32.totalorder %s12, 2
      %p81 = por %p79, %p80
      %p82 = scmp.ne.s32.totalorder %s74, %s77
      %p83 = scmp.eq.s32.totalorder %s12, 0
      %p84 = por %p82, %p83
      %p85 = scmp.ne.s32.totalorder %s74, %s77
      %p86 = scmp.eq.s32.totalorder %s17, 2
      %p87 = por %p85, %p86
      %p88 = scmp.ne.s32.totalorder %s77, %s78
      %p89 = scmp.eq.s32.totalorder %s17, 0
      %p90 = por %p88, %p89
      %p91 = scmp.ne.s32.totalorder %s77, %s78
      %p92 = scmp.eq.s32.totalorder %s18, 2
      %p93 = por %p91, %p92
      %p95 = scmp.ne.s32.totalorder %s78, %s94
      %p96 = scmp.eq.s32.totalorder %s18, 0
      %p97 = por %p95, %p96
      %s98 = ssub.s32 %s12, %s19
      %p99 = scmp.eq.s32.totalorder %s98, 0
      %s101 = sadd.s32 %s100, 1
      %s102 = scalar_select %p99, %s100, %s101
      %p105 = pneg %p99
      %p106 = scmp.eq.s32.totalorder %s12, 2
      %p107 = por %p105, %p106
      %p108 = scmp.ne.s32.totalorder %s100, %s103
      %p109 = scmp.eq.s32.totalorder %s12, 0
      %p110 = por %p108, %p109
      %p111 = scmp.ne.s32.totalorder %s100, %s103
      %p112 = scmp.eq.s32.totalorder %s17, 2
      %p113 = por %p111, %p112
      %p114 = scmp.ne.s32.totalorder %s103, %s104
      %p115 = scmp.eq.s32.totalorder %s17, 0
      %p116 = por %p114, %p115
      %p117 = scmp.ne.s32.totalorder %s103, %s104
      %p118 = scmp.eq.s32.totalorder %s18, 2
      %p119 = por %p117, %p118
      %p121 = scmp.ne.s32.totalorder %s104, %s120
      %p122 = scmp.eq.s32.totalorder %s18, 0
      %p123 = por %p121, %p122
      %p124 = scmp.le.s32.totalorder 1, %s12
      %p125 = scmp.lt.s32.totalorder %s12, 4
      %p126 = pnand %p124, %p125
      %p127 = pneg %p126
      // Predicated region
      $region9: #{tpu_custom_call.1} parent=5 // pred_check
        _
      $region10: #{tpu_custom_call.1} parent=5 // pred_check_branch
        %129 = sbr.rel (%p126) target = $region12
      $region11: #{tpu_custom_call.1} parent=5 // pred_region
        %s130 = ssub.s32 %s12, 1
      $region12: #{tpu_custom_call.1} parent=5 // pred_fallthru
        _
      %p131 = scmp.lt.s32.totalorder %s12, 3
      // Predicated region
      $region13: #{tpu_custom_call.1} parent=5 // pred_check
        %p132 = pneg %p131
      $region14: #{tpu_custom_call.1} parent=5 // pred_check_branch
        %134 = sbr.rel (%p132) target = $region16
      $region15: #{tpu_custom_call.1} parent=5 // pred_region
        // Predicated region
        $region17: #{tpu_custom_call.1} parent=15 // pred_check
          %p135 = pneg %p32
        $region18: #{tpu_custom_call.1} parent=15 // pred_check_branch
          %137 = sbr.rel (%p135) target = $region20
        $region19: #{tpu_custom_call.1} parent=15 // pred_region
          %p138 = scmp.lt.s32.totalorder %s12, 2
          %s139 = scalar_select %p138, %s12, 2
          %s140 = smul.addr %s139, 8
          %s141 = scalar_lea.vmem %s0, %s140
        $region20: #{tpu_custom_call.1} parent=15 // pred_fallthru
          _
        // Predicated region
        $region21: #{tpu_custom_call.1} parent=15 // pred_check
          %p142 = pneg %p58
        $region22: #{tpu_custom_call.1} parent=15 // pred_check_branch
          %144 = sbr.rel (%p142) target = $region24
        $region23: #{tpu_custom_call.1} parent=15 // pred_region
          %s145 = sand.u32 %s48, 1
          %s146 = scalar_lea.sflag [#allocation3], %s145
          %s147 = sand.u32 %s48, 1
          %s148 = smul.addr %s147, 8
          %s149 = scalar_lea.vmem [#allocation2], %s148
          %s151 = ssub.s32 128, 128
          %152 = vsyncadd %s146, %s151
          %s153 = smul.addr %s12, 128
          %s154 = scalar_lea.hbm %s1, %s153
          %s156 = sshll.u32 %s149, 4
          %s157 = int_to_ptr.vmem [resolvable:$true] %s156
          %159 = dma.hbm_to_vmem [thread:$0]  %s154, 128, %s157, %s146
        $region24: #{tpu_custom_call.1} parent=15 // pred_fallthru
          _
        // Predicated region
        $region25: #{tpu_custom_call.1} parent=15 // pred_check
          %p160 = pneg %p84
        $region26: #{tpu_custom_call.1} parent=15 // pred_check_branch
          %162 = sbr.rel (%p160) target = $region28
        $region27: #{tpu_custom_call.1} parent=15 // pred_region
          %p163 = scmp.lt.s32.totalorder %s12, 2
          %s164 = scalar_select %p163, %s12, 2
          %s165 = smul.addr %s164, 8
          %s166 = scalar_lea.vmem %s2, %s165
        $region28: #{tpu_custom_call.1} parent=15 // pred_fallthru
          _
      $region16: #{tpu_custom_call.1} parent=5 // pred_fallthru
        _
      %p167 = scmp.le.s32.totalorder 1, %s12
      %p168 = scmp.lt.s32.totalorder %s12, 4
      %p169 = pnand %p167, %p168
      %p170 = pneg %p169
      // Predicated region
      $region29: #{tpu_custom_call.1} parent=5 // pred_check
        _
      $region30: #{tpu_custom_call.1} parent=5 // pred_check_branch
        %172 = sbr.rel (%p169) target = $region32
      $region31: #{tpu_custom_call.1} parent=5 // pred_region
        %s173 = ssub.s32 %s12, 1
        %s174 = sand.u32 %s51, 1
        %s175 = scalar_lea.sflag [#allocation3], %s174
        %s176 = sand.u32 %s51, 1
        %s177 = smul.addr %s176, 8
        %s178 = scalar_lea.vmem [#allocation2], %s177
        // Predicated region
        $region33: #{tpu_custom_call.1} parent=31 // pred_check
          %p179 = pneg %p64
        $region34: #{tpu_custom_call.1} parent=31 // pred_check_branch
          %181 = sbr.rel (%p179) target = $region36
        $region35: #{tpu_custom_call.1} parent=31 // pred_region
          %182 = dma.done %s175, 128
        $region36: #{tpu_custom_call.1} parent=31 // pred_fallthru
          _
        %p183 = scmp.lt.s32.totalorder %s17, 2
        %s184 = scalar_select %p183, %s17, 2
        %s185 = smul.addr %s184, 8
        %s186 = scalar_lea.vmem %s0, %s185
        %p187 = pneg %p38
        %p188 = pneg %p35
        %s189 = sand.u32 %s51, 1
        %s190 = scalar_lea.sflag [#allocation3], %s189
        %s191 = sand.u32 %s51, 1
        %s192 = smul.addr %s191, 8
        %s193 = scalar_lea.vmem [#allocation2], %s192
        %p194 = pneg %p64
        %p195 = pneg %p61
        %p196 = scmp.lt.s32.totalorder %s17, 2
        %s197 = scalar_select %p196, %s17, 2
        %s198 = smul.addr %s197, 8
        %s199 = scalar_lea.vmem %s2, %s198
        %p200 = pneg %p90
        %p201 = pneg %p87
        %p202 = pneg %p116
        %p203 = pneg %p113
        %p204 = scmp.lt.s32.totalorder %s17, 2
        %s205 = scalar_select %p204, %s17, 2
        %s206 = scalar_lea.vmem %s3, %s205
        %p207 = scmp.lt.s32.totalorder %s17, 2
        %s208 = scalar_select %p207, %s17, 2
        %s209 = smul.addr %s208, 8
        %s210 = scalar_lea.vmem %s0, %s209
        %p211 = scmp.lt.s32.totalorder %s17, 2
        %s212 = scalar_select %p211, %s17, 2
        %s213 = smul.addr %s212, 8
        %s214 = scalar_lea.vmem %s2, %s213
        %p215 = scmp.lt.s32.totalorder %s17, 2
        %s216 = scalar_select %p215, %s17, 2
        %s217 = scalar_lea.vmem %s3, %s216
        %v218 = vld [vmem:[%s210] sm:$0xff]
        %v219 = vld [vmem:[%s178] sm:$0xff]
        %v220 = vmul.f32 %v218, %v219
        %221 = vadd.xlane.f32.xlu0 %v220
        %v222 = vpop.xlane.xlu0 %221
        %v223 = vmul.f32 %v218, %v218
        %224 = vadd.xlane.f32.xlu0 %v223
        %v225 = vpop.xlane.xlu0 %224
        %v226 = vmul.f32 %v219, %v219
        %227 = vadd.xlane.f32.xlu0 %v226
        %v228 = vpop.xlane.xlu0 %227
        %v229 = vmul.f32 %v225, %v228
        %v230 = vmax.f32 %v229, 1e-16
        %v231 = vrsqrt.pop %v230
        %v232 = vmul.f32 %v222, %v231
        %v233 = vld [vmem:[%s214] sm:$0xff]
        %v234 = vsub.f32 %v233, %v232
        %v235 = vmul.f32 %v234, %v234
        %vm236 = vcmask 7168
        %v237 = vsel %vm236, %v235, 0.0
        %238 = vadd.xlane.f32.xlu0 %v237
        %v239 = vpop.xlane.xlu0 %238
        %v240 = vrot.slane %v239, 4
        %v241 = vadd.f32 %v239, %v240
        %v242 = vrot.slane %v241, 2
        %v243 = vadd.f32 %v241, %v242
        %v244 = vrot.slane %v243, 1
        %v245 = vadd.f32 %v243, %v244
        %s246 = vtos %v245
        %v247 = vstv %s246
        %v248 = vadd.f32 %v247, 0.0
        %vm249 = vcmask 0
        %250 = vst.msk [vmem:[%s217] sm:$0x1] %vm249, %v248
        %p251 = scmp.lt.s32.totalorder %s17, 2
        %s252 = scalar_select %p251, %s17, 2
        %s253 = scalar_lea.vmem %s3, %s252
        // Predicated region
        $region37: #{tpu_custom_call.1} parent=31 // pred_check
          %p254 = pneg %p113
        $region38: #{tpu_custom_call.1} parent=31 // pred_check_branch
          %256 = sbr.rel (%p254) target = $region40
        $region39: #{tpu_custom_call.1} parent=31 // pred_region
          _
        $region40: #{tpu_custom_call.1} parent=31 // pred_fallthru
          _
      $region32: #{tpu_custom_call.1} parent=5 // pred_fallthru
        _
      %p257 = scmp.le.s32.totalorder 2, %s12
      // Predicated region
      $region41: #{tpu_custom_call.1} parent=5 // pred_check
        %p258 = pneg %p257
      $region42: #{tpu_custom_call.1} parent=5 // pred_check_branch
        %260 = sbr.rel (%p258) target = $region44
      $region43: #{tpu_custom_call.1} parent=5 // pred_region
        %s261 = ssub.s32 %s12, 2
        // Predicated region
        $region45: #{tpu_custom_call.1} parent=43 // pred_check
          %p262 = pneg %p119
        $region46: #{tpu_custom_call.1} parent=43 // pred_check_branch
          %264 = sbr.rel (%p262) target = $region48
        $region47: #{tpu_custom_call.1} parent=43 // pred_region
          %p265 = scmp.lt.s32.totalorder %s18, 2
          %s266 = scalar_select %p265, %s18, 2
          %s267 = scalar_lea.vmem %s3, %s266
        $region48: #{tpu_custom_call.1} parent=43 // pred_fallthru
          _
      $region44: #{tpu_custom_call.1} parent=5 // pred_fallthru
        _
    $region6: #{tpu_custom_call.1} parent=1 // loop_footer
      %s16 = sadd.s32 1, %s12
    $region7: #{tpu_custom_call.1} parent=1 // loop_footer_branch
      %11 = sbr.rel target = $region3
    $region8: #{tpu_custom_call.1} parent=1 // loop_exit
      _
    %268 = vsyncpa [#allocation3], 1
    %s269 = scalar_lea.sflag [#allocation3], 1
    %270 = vsyncpa %s269, 1

</llo_original>
